<compile_context>
chip_gen: v5e
topology: v5e:2x2
jax: 0.10.0
libtpu: 0.0.40
codegen_flags: <defaults>
</compile_context>

<pallas_src>
import functools
import math

import jax
import jax.numpy as jnp
from jax.experimental import pallas as pl
from jax.experimental.pallas import tpu as pltpu


# ----------------------------------------------------------------------------
# Small helpers
# ----------------------------------------------------------------------------
def _round_up(x, m):
    return ((x + m - 1) // m) * m


def _round_down(x, m):
    return (x // m) * m


def _vmem_info():
    """Returns (row-tile VMEM budget, scoped-vmem limit cap) for this chip."""
    try:
        cap = pltpu.get_tpu_info().vmem_capacity_bytes
    except Exception:  # unknown chip / interpret mode: assume smallest (v7x)
        cap = 64 << 20
    if cap >= (100 << 20):        # v5e / v6e: 128 MiB physical VMEM
        return 28 << 20, 100 << 20
    return 10 << 20, 48 << 20     # v7x: 64 MiB physical, 32 MiB default scoped


def _resident_spec(shape, mode):
    """Constant-index (grid-resident) BlockSpec.  mode=pl.Buffered(1) disables
    the default double-buffering for blocks whose index never changes."""
    index_map = lambda *_: (0,) * len(shape)
    if mode is None:
        return pl.BlockSpec(shape, index_map)
    return pl.BlockSpec(shape, index_map, pipeline_mode=mode)


# ----------------------------------------------------------------------------
# Kernel 1: query path  (encoder -> relu -> fused [predictor_pad | proj] head)
# ----------------------------------------------------------------------------
def _query_kernel(x_ref, we_ref, be_ref, wc_ref, bc_ref, pred_ref, proj_ref,
                  *, nclass, ncls_pad):
    # features arrive f32; cast to bf16 on the VPU (free) -> halves the
    # feature-side HBM traffic vs. a wrapper-side cast pass.
    x = x_ref[...].astype(jnp.bfloat16)                            # (T, nfeat)
    h = jnp.dot(x, we_ref[...], preferred_element_type=jnp.float32)
    h = jnp.maximum(h + be_ref[...], 0.0)                          # (T, nhid) f32

    # Fused lane-dense head: W_cat = [W_pred padded to ncls_pad | W_proj].
    fused = jnp.dot(h.astype(jnp.bfloat16), wc_ref[...],
                    preferred_element_type=jnp.float32) + bc_ref[...]

    # log-softmax restricted to the first ncls_pad lanes (lane-aligned static
    # slice -> no layout copy, and EUP/XLU work scales with ncls_pad, not
    # ncls_pad + nhid).  Mask out the zero-padded logit lanes; math stays f32.
    logits = fused[:, :ncls_pad]
    col = jax.lax.broadcasted_iota(jnp.int32, logits.shape, dimension=1)
    is_logit = col < nclass
    masked = jnp.where(is_logit, logits, jnp.float32(-1e30))
    mmax = jnp.max(masked, axis=-1, keepdims=True)
    lse = jnp.log(jnp.sum(jnp.exp(masked - mmax), axis=-1, keepdims=True))

    pred_ref[...] = jnp.where(is_logit, logits - mmax - lse, 0.0)
    proj_ref[...] = fused[:, ncls_pad:]


def prepare_query_weights(params):
    """Hoisted per-parameter-set preprocessing (concat + pad + bf16 casts)."""
    w_enc, b_enc = params["w_enc"], params["b_enc"]
    w_pred, b_pred = params["w_pred"], params["b_pred"]
    w_proj, b_proj = params["w_proj"], params["b_proj"]
    nfeat, nhid = w_enc.shape
    nclass = w_pred.shape[1]
    ncls_pad = _round_up(nclass, 128)

    w_pred_p = jnp.pad(w_pred, ((0, 0), (0, ncls_pad - nclass)))
    b_pred_p = jnp.pad(b_pred, ((0, 0), (0, ncls_pad - nclass)))
    w_cat = jnp.concatenate([w_pred_p, w_proj], axis=1)            # (nhid, C)
    b_cat = jnp.concatenate([b_pred_p, b_proj], axis=1)            # (1, C)

    return dict(
        we_bf=w_enc.astype(jnp.bfloat16), be=b_enc,
        wc_bf=w_cat.astype(jnp.bfloat16), bc=b_cat,
        nfeat=nfeat, nhid=nhid, nclass=nclass, ncls_pad=ncls_pad,
    )


def _pick_row_tile(n, nfeat, ncls_pad, nhid, budget_bytes):
    c_out = ncls_pad + nhid
    # per row & per grid step: f32 feature tile + both f32 output tiles
    # (each double-buffered by the pipeline) + in-kernel f32 intermediates.
    per_row = 2 * nfeat * 4 + 2 * c_out * 4 + 2 * (nhid + c_out) * 4
    tile = _round_down(budget_bytes // max(per_row, 1), 128)
    tile = max(128, min(tile, 1024))
    if n <= 256:
        return min(n, tile)
    # Guarantee >= 2 grid steps so both of v7x's TensorCores get work
    # (one extra ~0.35us grid step is noise on single-TC v5e/v6e).
    return min(tile, max(128, _round_down(n // 2, 128)))


def query_path(features, prepared):
    n, nfeat = features.shape
    nhid = prepared["nhid"]
    nclass = prepared["nclass"]
    ncls_pad = prepared["ncls_pad"]
    c_out = ncls_pad + nhid
    assert prepared["nfeat"] == nfeat

    budget, vmem_cap = _vmem_info()
    tile_n = _pick_row_tile(n, nfeat, ncls_pad, nhid, budget)
    grid = (pl.cdiv(n, tile_n),)

    weight_bytes = (nfeat * nhid + nhid * c_out) * 2 + (nhid + c_out) * 4
    stream_bytes = 2 * tile_n * nfeat * 4 + 2 * tile_n * c_out * 4
    scratch_bytes = 4 * tile_n * c_out * 4
    vmem_limit = int(min(max(2 * weight_bytes + stream_bytes + scratch_bytes,
                             16 << 20), vmem_cap))

    cost = pl.CostEstimate(
        flops=2 * n * nfeat * nhid + 2 * n * nhid * c_out,
        transcendentals=n * ncls_pad,
        bytes_accessed=n * nfeat * 4 + weight_bytes + n * c_out * 4,
    )

    def run(resident_mode):
        return pl.pallas_call(
            functools.partial(_query_kernel, nclass=nclass, ncls_pad=ncls_pad),
            out_shape=(
                jax.ShapeDtypeStruct((n, ncls_pad), jnp.float32),  # log-softmax
                jax.ShapeDtypeStruct((n, nhid), jnp.float32),      # proj head
            ),
            grid_spec=pltpu.PrefetchScalarGridSpec(
                num_scalar_prefetch=0,
                grid=grid,
                in_specs=[
                    pl.BlockSpec((tile_n, nfeat), lambda i: (i, 0)),   # stream
                    _resident_spec((nfeat, nhid), resident_mode),      # W_enc
                    _resident_spec((1, nhid), resident_mode),          # b_enc
                    _resident_spec((nhid, c_out), resident_mode),      # W_cat
                    _resident_spec((1, c_out), resident_mode),         # b_cat
                ],
                out_specs=(
                    pl.BlockSpec((tile_n, ncls_pad), lambda i: (i, 0)),
                    pl.BlockSpec((tile_n, nhid), lambda i: (i, 0)),
                ),
            ),
            compiler_params=pltpu.CompilerParams(
                dimension_semantics=("parallel",),   # rows shard over v7x TCs
                vmem_limit_bytes=vmem_limit,
            ),
            cost_estimate=cost,
        )(features, prepared["we_bf"], prepared["be"],
          prepared["wc_bf"], prepared["bc"])

    try:
        pred_pad, proj = run(pl.Buffered(1))
    except Exception:
        # pipeline_mode=Buffered(1) unsupported on this jax build: fall back
        # to default double-buffered resident weights (correctness identical).
        pred_pad, proj = run(None)

    # Only the small (n, ncls_pad) buffer needs a narrow slice; the big proj
    # output is returned directly (no extra HBM pass).
    return pred_pad[:, :nclass], proj


# ----------------------------------------------------------------------------
# Kernel 2: support path (momentum update -> momentum MLP -> proj -> proto),
#           tiled over the nfeat (K) dimension with an accumulator scratch.
# ----------------------------------------------------------------------------
def _support_kernel(xs_ref, wm_ref, we_ref, bm_ref, be_ref, wj_ref, bj_ref,
                    pm_ref, wm_out_ref, bm_out_ref, proto_ref, h_acc,
                    *, m, nfeat, tk):
    k = pl.program_id(0)
    nk = pl.num_programs(0)

    # momentum update of this (tk, nhid) chunk of the momentum-encoder weight
    wm = m * wm_ref[...] + (1.0 - m) * we_ref[...]
    wm_out_ref[...] = wm                   # padded tail rows dropped on store

    @pl.when(k == 0)
    def _():
        h_acc[...] = jnp.zeros_like(h_acc)

    x = xs_ref[...]
    if nfeat % tk != 0:
        # last K block overhangs nfeat: zero both dot operands in the overhang
        # (garbage * garbage could be NaN/Inf and poison the accumulator)
        base = k * tk
        row = jax.lax.broadcasted_iota(jnp.int32, wm.shape, 0) + base
        wm = jnp.where(row < nfeat, wm, 0.0)
        col = jax.lax.broadcasted_iota(jnp.int32, x.shape, 1) + base
        x = jnp.where(col < nfeat, x, 0.0)

    # support path stays f32: it is tiny (nclass*nshot rows) and feeds the
    # prototypes, so accuracy beats MXU throughput here.
    h_acc[...] += jnp.dot(x, wm, preferred_element_type=jnp.float32)

    @pl.when(k == nk - 1)
    def _():
        bm = m * bm_ref[...] + (1.0 - m) * be_ref[...]
        bm_out_ref[...] = bm
        h = jnp.maximum(h_acc[...] + bm, 0.0)                      # (Ns, nhid)
        kq = jnp.dot(h, wj_ref[...],
                     preferred_element_type=jnp.float32) + bj_ref[...]
        # prototype mean as a tiny averaging matmul (nclass, Ns) @ (Ns, nhid)
        proto_ref[...] = jnp.dot(pm_ref[...], kq,
                                 preferred_element_type=jnp.float32)


def support_path(x_support, w_momt, b_momt, w_enc, b_enc, w_proj, b_proj,
                 nclass, nshot, m, tk=None):
    ns, nfeat = x_support.shape
    nhid = w_momt.shape[1]
    assert ns == nclass * nshot

    if tk is None:
        # keep K resident when it comfortably fits VMEM; otherwise stream the
        # weights in 512-column chunks (bounds VMEM on v7x, pipelines the DMAs)
        tk = nfeat if nfeat <= 2048 else 512
    tk = min(tk, nfeat)
    nk = pl.cdiv(nfeat, tk)

    proto_mat = (jnp.repeat(jnp.eye(nclass, dtype=jnp.float32), nshot, axis=1)
                 / nshot)

    def run(resident_mode):
        return pl.pallas_call(
            functools.partial(_support_kernel, m=float(m), nfeat=nfeat, tk=tk),
            out_shape=(
                jax.ShapeDtypeStruct((nfeat, nhid), jnp.float32),   # new w_momt
                jax.ShapeDtypeStruct((1, nhid), jnp.float32),       # new b_momt
                jax.ShapeDtypeStruct((nclass, nhid), jnp.float32),  # prototype
            ),
            grid_spec=pltpu.PrefetchScalarGridSpec(
                num_scalar_prefetch=0,
                grid=(nk,),
                in_specs=[
                    pl.BlockSpec((ns, tk), lambda k: (0, k)),        # x chunk
                    pl.BlockSpec((tk, nhid), lambda k: (k, 0)),      # w_momt
                    pl.BlockSpec((tk, nhid), lambda k: (k, 0)),      # w_enc
                    _resident_spec((1, nhid), resident_mode),        # b_momt
                    _resident_spec((1, nhid), resident_mode),        # b_enc
                    _resident_spec((nhid, nhid), resident_mode),     # w_proj
                    _resident_spec((1, nhid), resident_mode),        # b_proj
                    _resident_spec((nclass, ns), resident_mode),     # proto avg
                ],
                out_specs=(
                    pl.BlockSpec((tk, nhid), lambda k: (k, 0)),
                    pl.BlockSpec((1, nhid), lambda k: (0, 0)),
                    pl.BlockSpec((nclass, nhid), lambda k: (0, 0)),
                ),
                scratch_shapes=[pltpu.VMEM((ns, nhid), jnp.float32)],
            ),
            compiler_params=pltpu.CompilerParams(
                dimension_semantics=("arbitrary",),   # K is a reduction axis
            ),
        )(x_support, w_momt, w_enc, b_momt, b_enc, w_proj, b_proj, proto_mat)

    try:
        return run(pl.Buffered(1))
    except Exception:
        return run(None)


# ----------------------------------------------------------------------------
# Full forward
# ----------------------------------------------------------------------------
def agst_forward(params, features, idx_train, nclass, nshot, m,
                 prepared=None, support_tk=None):
    """Returns ((output, query_features, prototype), updated_params).

    updated_params carries the post-momentum-update momentum-encoder state
    (PyTorch mutates it in place; JAX is functional, so it is returned)."""
    if prepared is None:
        prepared = prepare_query_weights(params)

    output, query_features = query_path(features, prepared)

    x_support = features[idx_train]           # tiny gather, XLA glue
    w_momt_new, b_momt_new, prototype = support_path(
        x_support, params["w_momt"], params["b_momt"],
        params["w_enc"], params["b_enc"],
        params["w_proj"], params["b_proj"], nclass, nshot, m, tk=support_tk)

    updated_params = dict(params, w_momt=w_momt_new, b_momt=b_momt_new)
    return (output, query_features, prototype), updated_params


# ----------------------------------------------------------------------------
# Parameter init (mimics the PyTorch module: kaiming_uniform_(fan_out) on an
# (in_f, out_f) weight -> bound 1/sqrt(in_f); bias bound 1/sqrt(out_f))
# ----------------------------------------------------------------------------
def init_linear(key, in_f, out_f):
    kw, kb = jax.random.split(key)
    w_bound = 1.0 / math.sqrt(in_f)
    w = jax.random.uniform(kw, (in_f, out_f), jnp.float32, -w_bound, w_bound)
    b_bound = 1.0 / math.sqrt(out_f)
    b = jax.random.uniform(kb, (1, out_f), jnp.float32, -b_bound, b_bound)
    return w, b


def reference_forward(params, features, idx_train, nclass, nshot, m):
    """Pure-JAX f32 reference of AGST.forward (eval mode)."""
    w_momt = params["w_momt"] * m + params["w_enc"] * (1.0 - m)
    b_momt = params["b_momt"] * m + params["b_enc"] * (1.0 - m)
    h = jnp.maximum(features @ params["w_enc"] + params["b_enc"], 0.0)
    output = jax.nn.log_softmax(h @ params["w_pred"] + params["b_pred"], axis=-1)
    query_features = h @ params["w_proj"] + params["b_proj"]
    hk = jnp.maximum(features[idx_train] @ w_momt + b_momt, 0.0)
    kemb = hk @ params["w_proj"] + params["b_proj"]
    prototype = kemb.reshape(nclass, nshot, -1).sum(axis=1) / nshot
    return output, query_features, prototype, w_momt, b_momt


def _run_case(key, n, nfeat, nhid, nclass, nshot, m, support_tk=None):
    k_feat, k_enc, k_pred, k_proj, k_idx = jax.random.split(key, 5)
    features = jax.random.normal(k_feat, (n, nfeat), jnp.float32)
    idx_train = jax.random.permutation(k_idx, n)[: nclass * nshot]

    w_enc, b_enc = init_linear(k_enc, nfeat, nhid)
    w_pred, b_pred = init_linear(k_pred, nhid, nclass)
    w_proj, b_proj = init_linear(k_proj, nhid, nhid)
    params = dict(
        w_enc=w_enc, b_enc=b_enc, w_pred=w_pred, b_pred=b_pred,
        w_proj=w_proj, b_proj=b_proj,
        # momentum encoder initialized as a copy of the encoder (as in __init__)
        w_momt=w_enc, b_momt=b_enc,
    )

    prepared = prepare_query_weights(params)     # hoisted once per param set
    (output, query_features, prototype), new_params = agst_forward(
        params, features, idx_train, nclass, nshot, m,
        prepared=prepared, support_tk=support_tk)
    jax.block_until_ready((output, query_features, prototype, new_params))

    assert output.shape == (n, nclass)
    assert query_features.shape == (n, nhid)
    assert prototype.shape == (nclass, nhid)
    # log_softmax rows should exponentiate-sum to 1
    assert jnp.allclose(jnp.sum(jnp.exp(output), axis=-1), 1.0, atol=1e-4)

    ref_out, ref_qf, ref_proto, ref_wm, ref_bm = reference_forward(
        params, features, idx_train, nclass, nshot, m)
    assert jnp.allclose(output, ref_out, atol=2e-1)          # bf16 MXU path
    assert jnp.allclose(query_features, ref_qf, atol=2e-1)   # bf16 MXU path
    assert jnp.allclose(prototype, ref_proto, atol=5e-2)     # f32 support path
    assert jnp.allclose(new_params["w_momt"], ref_wm, atol=1e-5)
    assert jnp.allclose(new_params["b_momt"], ref_bm, atol=1e-5)


if __name__ == "__main__":
    root = jax.random.PRNGKey(0)
    k_small, k_large = jax.random.split(root)

    # small shapes consistent with the module (single-step grids)
    _run_case(k_small, n=16, nfeat=32, nhid=32, nclass=4, nshot=2, m=0.9)

    # larger case: multi-step row grid with a partial last tile, plus a
    # K-tiled support path with a masked tail block (support_tk=128, nfeat=320)
    _run_case(k_large, n=400, nfeat=320, nhid=128, nclass=5, nshot=3, m=0.99,
              support_tk=128)

    print("KERNEL_OK")
</pallas_src>

<mosaic_0001>
module attributes {stable_mosaic.version = 11 : i64} {
  func.func @_query_kernel(%arg0: i32, %arg1: memref<16x32xf32, #tpu.memory_space<vmem>>, %arg2: memref<32x32xbf16, #tpu.memory_space<vmem>>, %arg3: memref<1x32xf32, #tpu.memory_space<vmem>>, %arg4: memref<32x160xbf16, #tpu.memory_space<vmem>>, %arg5: memref<1x160xf32, #tpu.memory_space<vmem>>, %arg6: memref<16x128xf32, #tpu.memory_space<vmem>>, %arg7: memref<16x32xf32, #tpu.memory_space<vmem>>) attributes {dimension_semantics = [#tpu.dimension_semantics<parallel>], iteration_bounds = array<i64: 1>, scalar_prefetch = 0 : i64, scratch_operands = 0 : i64, tpu.core_type = #tpu.core_type<tc>, window_params = [{transform_indices = @transform_0, window_bounds = array<i64: 16, 32>}, {pipeline_mode = #tpu.pipeline_mode<synchronous>, transform_indices = @transform_1, window_bounds = array<i64: 32, 32>}, {pipeline_mode = #tpu.pipeline_mode<synchronous>, transform_indices = @transform_2, window_bounds = array<i64: 1, 32>}, {pipeline_mode = #tpu.pipeline_mode<synchronous>, transform_indices = @transform_3, window_bounds = array<i64: 32, 160>}, {pipeline_mode = #tpu.pipeline_mode<synchronous>, transform_indices = @transform_4, window_bounds = array<i64: 1, 160>}, {transform_indices = @transform_5, window_bounds = array<i64: 16, 128>}, {transform_indices = @transform_6, window_bounds = array<i64: 16, 32>}]} {
    %c0 = arith.constant 0 : index
    %c0_0 = arith.constant 0 : index
    %0 = vector.load %arg1[%c0, %c0_0] : memref<16x32xf32, #tpu.memory_space<vmem>>, vector<16x32xf32>
    %1 = arith.truncf %0 : vector<16x32xf32> to vector<16x32xbf16>
    %c0_1 = arith.constant 0 : index
    %c0_2 = arith.constant 0 : index
    %2 = vector.load %arg2[%c0_1, %c0_2] : memref<32x32xbf16, #tpu.memory_space<vmem>>, vector<32x32xbf16>
    %cst = arith.constant dense<0.000000e+00> : vector<16x32xf32>
    %3 = tpu.matmul %1, %2, %cst {dimension_numbers = #tpu.dot_dimension_numbers<[1], [0], [0], [1], [0, 0, 1, 1], [], []>} : vector<16x32xbf16>, vector<32x32xbf16>, vector<16x32xf32> -> vector<16x32xf32>
    %c0_3 = arith.constant 0 : index
    %c0_4 = arith.constant 0 : index
    %4 = vector.load %arg3[%c0_3, %c0_4] : memref<1x32xf32, #tpu.memory_space<vmem>>, vector<1x32xf32>
    %5 = vector.broadcast %4 : vector<1x32xf32> to vector<16x32xf32>
    %6 = arith.addf %3, %5 : vector<16x32xf32>
    %cst_5 = arith.constant 0.000000e+00 : f32
    %7 = vector.broadcast %cst_5 : f32 to vector<16x32xf32>
    %8 = arith.maximumf %6, %7 : vector<16x32xf32>
    %9 = arith.truncf %8 : vector<16x32xf32> to vector<16x32xbf16>
    %c0_6 = arith.constant 0 : index
    %c0_7 = arith.constant 0 : index
    %10 = vector.load %arg4[%c0_6, %c0_7] : memref<32x160xbf16, #tpu.memory_space<vmem>>, vector<32x160xbf16>
    %cst_8 = arith.constant dense<0.000000e+00> : vector<16x160xf32>
    %11 = tpu.matmul %9, %10, %cst_8 {dimension_numbers = #tpu.dot_dimension_numbers<[1], [0], [0], [1], [0, 0, 1, 1], [], []>} : vector<16x32xbf16>, vector<32x160xbf16>, vector<16x160xf32> -> vector<16x160xf32>
    %c0_9 = arith.constant 0 : index
    %c0_10 = arith.constant 0 : index
    %12 = vector.load %arg5[%c0_9, %c0_10] : memref<1x160xf32, #tpu.memory_space<vmem>>, vector<1x160xf32>
    %13 = vector.broadcast %12 : vector<1x160xf32> to vector<16x160xf32>
    %14 = arith.addf %11, %13 : vector<16x160xf32>
    %15 = vector.extract_strided_slice %14 {offsets = [0, 0], sizes = [16, 128], strides = [1, 1]} : vector<16x160xf32> to vector<16x128xf32>
    %16 = tpu.iota {dimensions = array<i32: 1>} : vector<16x128xi32>
    %c4_i32 = arith.constant 4 : i32
    %17 = vector.broadcast %c4_i32 : i32 to vector<16x128xi32>
    %18 = arith.cmpi slt, %16, %17 : vector<16x128xi32>
    %cst_11 = arith.constant -1.000000e+30 : f32
    %19 = vector.broadcast %cst_11 : f32 to vector<16x128xf32>
    %20 = arith.select %18, %15, %19 : vector<16x128xi1>, vector<16x128xf32>
    %cst_12 = arith.constant dense<0xFF800000> : vector<16xf32>
    %21 = vector.multi_reduction <maximumf>, %20, %cst_12 [1] : vector<16x128xf32> to vector<16xf32>
    %22 = vector.shape_cast %21 : vector<16xf32> to vector<16x1xf32>
    %23 = vector.broadcast %22 : vector<16x1xf32> to vector<16x128xf32>
    %24 = arith.subf %20, %23 : vector<16x128xf32>
    %25 = math.exp %24 : vector<16x128xf32>
    %cst_13 = arith.constant dense<0.000000e+00> : vector<16xf32>
    %26 = vector.multi_reduction <add>, %25, %cst_13 [1] : vector<16x128xf32> to vector<16xf32>
    %27 = vector.shape_cast %26 : vector<16xf32> to vector<16x1xf32>
    %28 = math.log %27 : vector<16x1xf32>
    %29 = vector.broadcast %22 : vector<16x1xf32> to vector<16x128xf32>
    %30 = arith.subf %15, %29 : vector<16x128xf32>
    %31 = vector.broadcast %28 : vector<16x1xf32> to vector<16x128xf32>
    %32 = arith.subf %30, %31 : vector<16x128xf32>
    %cst_14 = arith.constant 0.000000e+00 : f32
    %33 = vector.broadcast %cst_14 : f32 to vector<16x128xf32>
    %34 = arith.select %18, %32, %33 : vector<16x128xi1>, vector<16x128xf32>
    %c0_15 = arith.constant 0 : index
    %c0_16 = arith.constant 0 : index
    %35 = vector.load %arg6[%c0_15, %c0_16] : memref<16x128xf32, #tpu.memory_space<vmem>>, vector<16x128xf32>
    tpu.vector_store %arg6[%c0_15, %c0_16], %34 {strides = array<i32>} : memref<16x128xf32, #tpu.memory_space<vmem>>, vector<16x128xf32>,
    %36 = vector.extract_strided_slice %14 {offsets = [0, 128], sizes = [16, 32], strides = [1, 1]} : vector<16x160xf32> to vector<16x32xf32>
    %c0_17 = arith.constant 0 : index
    %c0_18 = arith.constant 0 : index
    %37 = vector.load %arg7[%c0_17, %c0_18] : memref<16x32xf32, #tpu.memory_space<vmem>>, vector<16x32xf32>
    tpu.vector_store %arg7[%c0_17, %c0_18], %36 {strides = array<i32>} : memref<16x32xf32, #tpu.memory_space<vmem>>, vector<16x32xf32>,
    return
  }
  func.func @transform_0(%arg0: i32) -> (i32, i32) {
    %c0_i32 = arith.constant 0 : i32
    %c0_i32_0 = arith.constant 0 : i32
    return %arg0, %c0_i32 : i32, i32
  }
  func.func @transform_1(%arg0: i32) -> (i32, i32) {
    %c0_i32 = arith.constant 0 : i32
    %c0_i32_0 = arith.constant 0 : i32
    %c0_i32_1 = arith.constant 0 : i32
    return %c0_i32, %c0_i32_0 : i32, i32
  }
  func.func @transform_2(%arg0: i32) -> (i32, i32) {
    %c0_i32 = arith.constant 0 : i32
    %c0_i32_0 = arith.constant 0 : i32
    %c0_i32_1 = arith.constant 0 : i32
    return %c0_i32, %c0_i32_0 : i32, i32
  }
  func.func @transform_3(%arg0: i32) -> (i32, i32) {
    %c0_i32 = arith.constant 0 : i32
    %c0_i32_0 = arith.constant 0 : i32
    %c0_i32_1 = arith.constant 0 : i32
    return %c0_i32, %c0_i32_0 : i32, i32
  }
  func.func @transform_4(%arg0: i32) -> (i32, i32) {
    %c0_i32 = arith.constant 0 : i32
    %c0_i32_0 = arith.constant 0 : i32
    %c0_i32_1 = arith.constant 0 : i32
    return %c0_i32, %c0_i32_0 : i32, i32
  }
  func.func @transform_5(%arg0: i32) -> (i32, i32) {
    %c0_i32 = arith.constant 0 : i32
    %c0_i32_0 = arith.constant 0 : i32
    return %arg0, %c0_i32 : i32, i32
  }
  func.func @transform_6(%arg0: i32) -> (i32, i32) {
    %c0_i32 = arith.constant 0 : i32
    %c0_i32_0 = arith.constant 0 : i32
    return %arg0, %c0_i32 : i32, i32
  }
}

module attributes {stable_mosaic.version = 11 : i64} {
  func.func @_query_kernel(%arg0: i32, %arg1: memref<16x32xf32, #tpu.memory_space<vmem>>, %arg2: memref<32x32xbf16, #tpu.memory_space<vmem>>, %arg3: memref<1x32xf32, #tpu.memory_space<vmem>>, %arg4: memref<32x160xbf16, #tpu.memory_space<vmem>>, %arg5: memref<1x160xf32, #tpu.memory_space<vmem>>, %arg6: memref<16x128xf32, #tpu.memory_space<vmem>>, %arg7: memref<16x32xf32, #tpu.memory_space<vmem>>) attributes {dimension_semantics = [#tpu.dimension_semantics<parallel>], iteration_bounds = array<i64: 1>, scalar_prefetch = 0 : i64, scratch_operands = 0 : i64, tpu.core_type = #tpu.core_type<tc>, window_params = [{transform_indices = @transform_0, window_bounds = array<i64: 16, 32>}, {pipeline_mode = #tpu.pipeline_mode<synchronous>, transform_indices = @transform_1, window_bounds = array<i64: 32, 32>}, {pipeline_mode = #tpu.pipeline_mode<synchronous>, transform_indices = @transform_2, window_bounds = array<i64: 1, 32>}, {pipeline_mode = #tpu.pipeline_mode<synchronous>, transform_indices = @transform_3, window_bounds = array<i64: 32, 160>}, {pipeline_mode = #tpu.pipeline_mode<synchronous>, transform_indices = @transform_4, window_bounds = array<i64: 1, 160>}, {transform_indices = @transform_5, window_bounds = array<i64: 16, 128>}, {transform_indices = @transform_6, window_bounds = array<i64: 16, 32>}]} {
    %c0 = arith.constant 0 : index
    %c0_0 = arith.constant 0 : index
    %0 = vector.load %arg1[%c0, %c0_0] : memref<16x32xf32, #tpu.memory_space<vmem>>, vector<16x32xf32>
    %1 = arith.truncf %0 : vector<16x32xf32> to vector<16x32xbf16>
    %c0_1 = arith.constant 0 : index
    %c0_2 = arith.constant 0 : index
    %2 = vector.load %arg2[%c0_1, %c0_2] : memref<32x32xbf16, #tpu.memory_space<vmem>>, vector<32x32xbf16>
    %cst = arith.constant dense<0.000000e+00> : vector<16x32xf32>
    %3 = tpu.matmul %1, %2, %cst {dimension_numbers = #tpu.dot_dimension_numbers<[1], [0], [0], [1], [0, 0, 1, 1], [], []>} : vector<16x32xbf16>, vector<32x32xbf16>, vector<16x32xf32> -> vector<16x32xf32>
    %c0_3 = arith.constant 0 : index
    %c0_4 = arith.constant 0 : index
    %4 = vector.load %arg3[%c0_3, %c0_4] : memref<1x32xf32, #tpu.memory_space<vmem>>, vector<1x32xf32>
    %5 = vector.broadcast %4 : vector<1x32xf32> to vector<16x32xf32>
    %6 = arith.addf %3, %5 : vector<16x32xf32>
    %cst_5 = arith.constant 0.000000e+00 : f32
    %7 = vector.broadcast %cst_5 : f32 to vector<16x32xf32>
    %8 = arith.maximumf %6, %7 : vector<16x32xf32>
    %9 = arith.truncf %8 : vector<16x32xf32> to vector<16x32xbf16>
    %c0_6 = arith.constant 0 : index
    %c0_7 = arith.constant 0 : index
    %10 = vector.load %arg4[%c0_6, %c0_7] : memref<32x160xbf16, #tpu.memory_space<vmem>>, vector<32x160xbf16>
    %cst_8 = arith.constant dense<0.000000e+00> : vector<16x160xf32>
    %11 = tpu.matmul %9, %10, %cst_8 {dimension_numbers = #tpu.dot_dimension_numbers<[1], [0], [0], [1], [0, 0, 1, 1], [], []>} : vector<16x32xbf16>, vector<32x160xbf16>, vector<16x160xf32> -> vector<16x160xf32>
    %c0_9 = arith.constant 0 : index
    %c0_10 = arith.constant 0 : index
    %12 = vector.load %arg5[%c0_9, %c0_10] : memref<1x160xf32, #tpu.memory_space<vmem>>, vector<1x160xf32>
    %13 = vector.broadcast %12 : vector<1x160xf32> to vector<16x160xf32>
    %14 = arith.addf %11, %13 : vector<16x160xf32>
    %15 = vector.extract_strided_slice %14 {offsets = [0, 0], sizes = [16, 128], strides = [1, 1]} : vector<16x160xf32> to vector<16x128xf32>
    %16 = tpu.iota {dimensions = array<i32: 1>} : vector<16x128xi32>
    %c4_i32 = arith.constant 4 : i32
    %17 = vector.broadcast %c4_i32 : i32 to vector<16x128xi32>
    %18 = arith.cmpi slt, %16, %17 : vector<16x128xi32>
    %cst_11 = arith.constant -1.000000e+30 : f32
    %19 = vector.broadcast %cst_11 : f32 to vector<16x128xf32>
    %20 = arith.select %18, %15, %19 : vector<16x128xi1>, vector<16x128xf32>
    %cst_12 = arith.constant dense<0xFF800000> : vector<16xf32>
    %21 = vector.multi_reduction <maximumf>, %20, %cst_12 [1] : vector<16x128xf32> to vector<16xf32>
    %22 = vector.shape_cast %21 : vector<16xf32> to vector<16x1xf32>
    %23 = vector.broadcast %22 : vector<16x1xf32> to vector<16x128xf32>
    %24 = arith.subf %20, %23 : vector<16x128xf32>
    %25 = math.exp %24 : vector<16x128xf32>
    %cst_13 = arith.constant dense<0.000000e+00> : vector<16xf32>
    %26 = vector.multi_reduction <add>, %25, %cst_13 [1] : vector<16x128xf32> to vector<16xf32>
    %27 = vector.shape_cast %26 : vector<16xf32> to vector<16x1xf32>
    %28 = math.log %27 : vector<16x1xf32>
    %29 = vector.broadcast %22 : vector<16x1xf32> to vector<16x128xf32>
    %30 = arith.subf %15, %29 : vector<16x128xf32>
    %31 = vector.broadcast %28 : vector<16x1xf32> to vector<16x128xf32>
    %32 = arith.subf %30, %31 : vector<16x128xf32>
    %cst_14 = arith.constant 0.000000e+00 : f32
    %33 = vector.broadcast %cst_14 : f32 to vector<16x128xf32>
    %34 = arith.select %18, %32, %33 : vector<16x128xi1>, vector<16x128xf32>
    %c0_15 = arith.constant 0 : index
    %c0_16 = arith.constant 0 : index
    %35 = vector.load %arg6[%c0_15, %c0_16] : memref<16x128xf32, #tpu.memory_space<vmem>>, vector<16x128xf32>
    tpu.vector_store %arg6[%c0_15, %c0_16], %34 {strides = array<i32>} : memref<16x128xf32, #tpu.memory_space<vmem>>, vector<16x128xf32>,
    %36 = vector.extract_strided_slice %14 {offsets = [0, 128], sizes = [16, 32], strides = [1, 1]} : vector<16x160xf32> to vector<16x32xf32>
    %c0_17 = arith.constant 0 : index
    %c0_18 = arith.constant 0 : index
    %37 = vector.load %arg7[%c0_17, %c0_18] : memref<16x32xf32, #tpu.memory_space<vmem>>, vector<16x32xf32>
    tpu.vector_store %arg7[%c0_17, %c0_18], %36 {strides = array<i32>} : memref<16x32xf32, #tpu.memory_space<vmem>>, vector<16x32xf32>,
    return
  }
  func.func @transform_0(%arg0: i32) -> (i32, i32) {
    %c0_i32 = arith.constant 0 : i32
    %c0_i32_0 = arith.constant 0 : i32
    return %arg0, %c0_i32 : i32, i32
  }
  func.func @transform_1(%arg0: i32) -> (i32, i32) {
    %c0_i32 = arith.constant 0 : i32
    %c0_i32_0 = arith.constant 0 : i32
    %c0_i32_1 = arith.constant 0 : i32
    return %c0_i32, %c0_i32_0 : i32, i32
  }
  func.func @transform_2(%arg0: i32) -> (i32, i32) {
    %c0_i32 = arith.constant 0 : i32
    %c0_i32_0 = arith.constant 0 : i32
    %c0_i32_1 = arith.constant 0 : i32
    return %c0_i32, %c0_i32_0 : i32, i32
  }
  func.func @transform_3(%arg0: i32) -> (i32, i32) {
    %c0_i32 = arith.constant 0 : i32
    %c0_i32_0 = arith.constant 0 : i32
    %c0_i32_1 = arith.constant 0 : i32
    return %c0_i32, %c0_i32_0 : i32, i32
  }
  func.func @transform_4(%arg0: i32) -> (i32, i32) {
    %c0_i32 = arith.constant 0 : i32
    %c0_i32_0 = arith.constant 0 : i32
    %c0_i32_1 = arith.constant 0 : i32
    return %c0_i32, %c0_i32_0 : i32, i32
  }
  func.func @transform_5(%arg0: i32) -> (i32, i32) {
    %c0_i32 = arith.constant 0 : i32
    %c0_i32_0 = arith.constant 0 : i32
    return %arg0, %c0_i32 : i32, i32
  }
  func.func @transform_6(%arg0: i32) -> (i32, i32) {
    %c0_i32 = arith.constant 0 : i32
    %c0_i32_0 = arith.constant 0 : i32
    return %arg0, %c0_i32 : i32, i32
  }
}

</mosaic_0001>

<llo_original>
// kernel: tpu_custom_call.1
$region0: #{tpu_custom_call.1}
  #allocation0 [shape = 'u32[]', space=smem, size = 0x4, offset = 0x4, fixed_abs, tag = 'smem constant byte address 0x4 - core index']
  #allocation1 [shape = 'u32[72,128]{1,0:T(1,128)}', space=vmem, size = 0x9000, scoped, tag = 'internal scratch']
  %s0 = inlined_call_operand.hbm [shape: f32[16,32], index: 0, kind: input, shape index: {}]
  %s1 = inlined_call_operand.hbm [shape: bf16[32,32], index: 1, kind: input, shape index: {}]
  %s2 = inlined_call_operand.vmem [shape: f32[1,32], index: 2, kind: input, shape index: {}]
  %s3 = inlined_call_operand.hbm [shape: bf16[32,160], index: 3, kind: input, shape index: {}]
  %s4 = inlined_call_operand.vmem [shape: f32[1,160], index: 4, kind: input, shape index: {}]
  %s5 = inlined_call_operand.hbm [shape: f32[16,128], index: 5, kind: output, shape index: {0}]
  %s6 = inlined_call_operand.hbm [shape: f32[16,32], index: 6, kind: output, shape index: {1}]
  %7 = xla_tuple %s5, %s6
  %s8 = sld [smem:[#allocation0]]
  $region50: #{tpu_custom_call.1} parent=0
    _
  %s10 = ssub.s32 1, %s8
  %s11 = scalar_select 0, %s10, %s8
  $region1: #{tpu_custom_call.1} parent=0
    #allocation2 [shape = 'u8[8192]{0}', space=vmem, size = 0x2000, scoped, tag = 'input window, operand 0, single buffered']
    #allocation3 [shape = 's32[1]{0}', space=sflag, size = 0x4, scoped, tag = 'scoped memory for tpu_custom_call.1']
    #allocation4 [shape = 's32[1]{0}', space=sflag, size = 0x4, scoped, tag = 'scoped memory for tpu_custom_call.1']
    #allocation5 [shape = 'u8[8192]{0}', space=vmem, size = 0x2000, scoped, tag = 'input window, operand 1, single buffered']
    #allocation6 [shape = 's32[1]{0}', space=sflag, size = 0x4, scoped, tag = 'scoped memory for tpu_custom_call.1']
    #allocation7 [shape = 'u8[16384]{0}', space=vmem, size = 0x4000, scoped, tag = 'input window, operand 3, single buffered']
    #allocation8 [shape = 'u8[8192]{0}', space=vmem, size = 0x2000, scoped, tag = 'output window, operand 0, single buffered']
    #allocation9 [shape = 'u8[8192]{0}', space=vmem, size = 0x2000, scoped, tag = 'output window, operand 1, single buffered']
    #allocation10 [shape = 's32[1]{0}', space=sflag, size = 0x4, scoped, tag = 'scoped memory for tpu_custom_call.1']
    %12 = vsyncpa [#allocation3], 0
    %13 = vsyncpa [#allocation6], 0
    %14 = vsyncpa [#allocation4], 0
    %15 = vsyncpa [#allocation10], 0
    // Predicated region
    $region2: #{tpu_custom_call.1} parent=1 // pred_check
      _
    $region3: #{tpu_custom_call.1} parent=1 // pred_check_branch
      %17 = sbr.rel (0) target = $region5
    $region4: #{tpu_custom_call.1} parent=1 // pred_region
      %19 = vsyncadd [#allocation3], 0
      %s20 = sshll.u32 %s0, 4
      %s21 = int_to_ptr.hbm [resolvable:$true] %s20
      %s22 = sshll.u32 [#allocation2], 4
      %s23 = int_to_ptr.vmem [resolvable:$true] %s22
      %28 = dma.hbm_to_vmem [thread:$0]  %s21, 256, %s23, [#allocation3], 128, 128, 8
    $region5: #{tpu_custom_call.1} parent=1 // pred_fallthru
      _
    // Predicated region
    $region6: #{tpu_custom_call.1} parent=1 // pred_check
      _
    $region7: #{tpu_custom_call.1} parent=1 // pred_check_branch
      %30 = sbr.rel (0) target = $region9
    $region8: #{tpu_custom_call.1} parent=1 // pred_region
      %32 = vsyncadd [#allocation6], 0
      %s33 = sshll.u32 %s1, 4
      %s34 = int_to_ptr.hbm [resolvable:$true] %s33
      %s35 = sshll.u32 [#allocation5], 4
      %s36 = int_to_ptr.vmem [resolvable:$true] %s35
      %41 = dma.hbm_to_vmem [thread:$0]  %s34, 256, %s36, [#allocation6], 64, 64, 4
    $region9: #{tpu_custom_call.1} parent=1 // pred_fallthru
      _
    // Predicated region
    $region10: #{tpu_custom_call.1} parent=1 // pred_check
      _
    $region11: #{tpu_custom_call.1} parent=1 // pred_check_branch
      %43 = sbr.rel (0) target = $region13
    $region12: #{tpu_custom_call.1} parent=1 // pred_region
      _
    $region13: #{tpu_custom_call.1} parent=1 // pred_fallthru
      _
    // Predicated region
    $region14: #{tpu_custom_call.1} parent=1 // pred_check
      _
    $region15: #{tpu_custom_call.1} parent=1 // pred_check_branch
      %45 = sbr.rel (0) target = $region17
    $region16: #{tpu_custom_call.1} parent=1 // pred_region
      %47 = vsyncadd [#allocation6], 0
      %s48 = sshll.u32 %s3, 4
      %s49 = int_to_ptr.hbm [resolvable:$true] %s48
      %s50 = sshll.u32 [#allocation7], 4
      %s51 = int_to_ptr.vmem [resolvable:$true] %s50
      %56 = dma.hbm_to_vmem [thread:$0]  %s49, 512, %s51, [#allocation6], 128, 128, 8
    $region17: #{tpu_custom_call.1} parent=1 // pred_fallthru
      _
    // Predicated region
    $region18: #{tpu_custom_call.1} parent=1 // pred_check
      _
    $region19: #{tpu_custom_call.1} parent=1 // pred_check_branch
      %58 = sbr.rel (0) target = $region21
    $region20: #{tpu_custom_call.1} parent=1 // pred_region
      _
    $region21: #{tpu_custom_call.1} parent=1 // pred_fallthru
      _
    // Predicated region
    $region22: #{tpu_custom_call.1} parent=1 // pred_check
      _
    $region23: #{tpu_custom_call.1} parent=1 // pred_check_branch
      %60 = sbr.rel (0) target = $region25
    $region24: #{tpu_custom_call.1} parent=1 // pred_region
      %62 = dma.done [#allocation3], 256
    $region25: #{tpu_custom_call.1} parent=1 // pred_fallthru
      _
    // Predicated region
    $region26: #{tpu_custom_call.1} parent=1 // pred_check
      _
    $region27: #{tpu_custom_call.1} parent=1 // pred_check_branch
      %64 = sbr.rel (0) target = $region29
    $region28: #{tpu_custom_call.1} parent=1 // pred_region
      %66 = dma.done [#allocation6], 256
    $region29: #{tpu_custom_call.1} parent=1 // pred_fallthru
      _
    // Predicated region
    $region30: #{tpu_custom_call.1} parent=1 // pred_check
      _
    $region31: #{tpu_custom_call.1} parent=1 // pred_check_branch
      %68 = sbr.rel (0) target = $region33
    $region32: #{tpu_custom_call.1} parent=1 // pred_region
      %70 = dma.done [#allocation6], 512
    $region33: #{tpu_custom_call.1} parent=1 // pred_fallthru
      _
    %v72 = vld [vmem:[#allocation2] sm:$0xff]
    %v73 = vld [vmem:[#allocation2 + $0x8] sm:$0xff]
    %v74 = vpack.c.bf16 %v73, %v72
    %v75 = vld [vmem:[#allocation5] sm:$0xf]
    %v76 = vld [vmem:[#allocation5 + $0x4] sm:$0xf]
    %v77 = vld [vmem:[#allocation5 + $0x8] sm:$0xf]
    %v78 = vld [vmem:[#allocation5 + $0xc] sm:$0xf]
    %v79 = vld [vmem:[%s2] sm:$0x1]
    %v81 = vperm.slane %v79, 0
    %v87 = vunpack.c.l.b16 %v75
    %v88 = vunpack.c.l.b16 %v76
    %v89 = vunpack.c.l.b16 %v77
    %v90 = vunpack.c.l.b16 %v78
    %v91 = vpack.c.b16 %v88, %v87
    %v92 = vpack.c.b16 %v90, %v89
    %vm95 = vcmask 261120
    %v97 = vsel %vm95, %v74, 0
    %99 = vmatpush.bf16.msra.mxu0 0
    %100 = vmatpush.bf16.msra.mxu0 0
    %101 = vmatpush.bf16.msra.mxu0 0
    %102 = vmatpush.bf16.msra.mxu0 0
    %103 = vmatpush.bf16.msra.mxu0 0
    %104 = vmatpush.bf16.msra.mxu0 0
    %105 = vmatpush.bf16.msra.mxu0 %v92
    %106 = vmatpush.bf16.msra.mxu0 %v91
    %107 = vmatmul.bf16.gmra.mxu0 %v97
    %v108 = vpop.f32.mrf.mxu0
    %v109 = vadd.f32 %v81, %v108
    %v110 = vpop.f32.mrf.mxu0
    %v111 = vadd.f32 %v81, %v110
    %112 = vdwg.mxu0
    %v113 = vmax.f32 %v109, 0.0
    %v114 = vmax.f32 %v111, 0.0
    %v115 = vpack.c.bf16 %v114, %v113
    %v116 = vld [vmem:[#allocation7] sm:$0xff]
    %v117 = vld [vmem:[#allocation7 + $0x8] sm:$0xff]
    %v118 = vld [vmem:[#allocation7 + $0x10] sm:$0xff]
    %v119 = vld [vmem:[#allocation7 + $0x18] sm:$0xff]
    %v120 = vld [vmem:[%s4] sm:$0x3]
    %v122 = vperm.slane %v120, 0
    %v123 = vperm.slane %v120, 1
    %v130 = vunpack.c.l.b16 %v116
    %v131 = vunpack.c.h.b16 %v116
    %v132 = vunpack.c.l.b16 %v117
    %v133 = vunpack.c.h.b16 %v117
    %v134 = vunpack.c.l.b16 %v118
    %v135 = vunpack.c.h.b16 %v118
    %v136 = vunpack.c.l.b16 %v119
    %v137 = vunpack.c.h.b16 %v119
    %v138 = vpack.c.b16 %v132, %v130
    %v139 = vpack.c.b16 %v133, %v131
    %v140 = vpack.c.b16 %v136, %v134
    %v141 = vpack.c.b16 %v137, %v135
    %v147 = vsel %vm95, %v115, 0
    %149 = vmatpush.bf16.msra.mxu0 0
    %150 = vmatpush.bf16.msra.mxu0 0
    %151 = vmatpush.bf16.msra.mxu0 0
    %152 = vmatpush.bf16.msra.mxu0 0
    %153 = vmatpush.bf16.msra.mxu0 0
    %154 = vmatpush.bf16.msra.mxu0 0
    %155 = vmatpush.bf16.msra.mxu0 %v140
    %156 = vmatpush.bf16.msra.mxu0 %v138
    %157 = vmatmul.bf16.gmra.mxu0 %v147
    %v158 = vpop.f32.mrf.mxu0
    %v159 = vadd.f32 %v122, %v158
    %v160 = vpop.f32.mrf.mxu0
    %v161 = vadd.f32 %v122, %v160
    %162 = vdwg.mxu0
    %163 = vmatpush.bf16.msra.mxu0 0
    %164 = vmatpush.bf16.msra.mxu0 0
    %165 = vmatpush.bf16.msra.mxu0 0
    %166 = vmatpush.bf16.msra.mxu0 0
    %167 = vmatpush.bf16.msra.mxu0 0
    %168 = vmatpush.bf16.msra.mxu0 0
    %169 = vmatpush.bf16.msra.mxu0 %v141
    %170 = vmatpush.bf16.msra.mxu0 %v139
    %171 = vmatmul.bf16.gmra.mxu0 %v147
    %v172 = vpop.f32.mrf.mxu0
    %v173 = vadd.f32 %v123, %v172
    %v174 = vpop.f32.mrf.mxu0
    %v175 = vadd.f32 %v123, %v174
    %176 = vdwg.mxu0
    %v177 = vlaneseq
    %v178 = vand.u32 %v177, 127
    %vm179 = vcmp.lt.s32.totalorder %v178, 4
    %v180 = vsel %vm179, %v159, -1e+30
    %v181 = vsel %vm179, %v161, -1e+30
    %182 = vmax.xlane.f32.xlu0 %v180
    %v183 = vpop.xlane.xlu0 %182
    %184 = vmax.xlane.f32.xlu0 %v181
    %v185 = vpop.xlane.xlu0 %184
    %v186 = vsub.f32 %v180, %v183
    %v187 = vsub.f32 %v181, %v185
    %v188 = vmul.f32 %v186, 1.442695
    %v189 = vpow.pop %v188
    %v190 = vmul.f32 %v187, 1.442695
    %v191 = vpow.pop %v190
    %192 = vadd.xlane.f32.xlu0 %v189
    %v193 = vpop.xlane.xlu0 %192
    %194 = vadd.xlane.f32.xlu0 %v191
    %v195 = vpop.xlane.xlu0 %194
    %v196 = vlog2.pop %v193
    %v197 = vmul.f32 %v196, 0.6931472
    %v198 = vlog2.pop %v195
    %v199 = vmul.f32 %v198, 0.6931472
    %v200 = vsub.f32 %v159, %v183
    %v201 = vsub.f32 %v161, %v185
    %v202 = vsub.f32 %v200, %v197
    %v203 = vsub.f32 %v201, %v199
    %v204 = vsel %vm179, %v202, 0.0
    %v205 = vsel %vm179, %v203, 0.0
    %206 = vst [vmem:[#allocation8] sm:$0xff] %v204
    %207 = vst [vmem:[#allocation8 + $0x8] sm:$0xff] %v205
    %208 = vst.msk [vmem:[#allocation9] sm:$0xff] %vm95, %v173
    %209 = vst.msk [vmem:[#allocation9 + $0x8] sm:$0xff] %vm95, %v175
    // Predicated region
    $region34: #{tpu_custom_call.1} parent=1 // pred_check
      _
    $region35: #{tpu_custom_call.1} parent=1 // pred_check_branch
      %211 = sbr.rel (0) target = $region37
    $region36: #{tpu_custom_call.1} parent=1 // pred_region
      %213 = vsyncadd [#allocation4], 0
      %s214 = sshll.u32 [#allocation8], 4
      %s215 = int_to_ptr.vmem [resolvable:$true] %s214
      %s216 = sshll.u32 %s5, 4
      %s217 = int_to_ptr.hbm [resolvable:$true] %s216
      %222 = dma.vmem_to_hbm [thread:$0]  %s215, 256, %s217, [#allocation4], 128, 128, 8
    $region37: #{tpu_custom_call.1} parent=1 // pred_fallthru
      _
    // Predicated region
    $region38: #{tpu_custom_call.1} parent=1 // pred_check
      _
    $region39: #{tpu_custom_call.1} parent=1 // pred_check_branch
      %224 = sbr.rel (0) target = $region41
    $region40: #{tpu_custom_call.1} parent=1 // pred_region
      %226 = vsyncadd [#allocation10], 0
      %s227 = sshll.u32 [#allocation9], 4
      %s228 = int_to_ptr.vmem [resolvable:$true] %s227
      %s229 = sshll.u32 %s6, 4
      %s230 = int_to_ptr.hbm [resolvable:$true] %s229
      %235 = dma.vmem_to_hbm [thread:$0]  %s228, 256, %s230, [#allocation10], 128, 128, 8
    $region41: #{tpu_custom_call.1} parent=1 // pred_fallthru
      _
    // Predicated region
    $region42: #{tpu_custom_call.1} parent=1 // pred_check
      _
    $region43: #{tpu_custom_call.1} parent=1 // pred_check_branch
      %237 = sbr.rel (0) target = $region45
    $region44: #{tpu_custom_call.1} parent=1 // pred_region
      %239 = dma.done [#allocation4], 256
    $region45: #{tpu_custom_call.1} parent=1 // pred_fallthru
      _
    // Predicated region
    $region46: #{tpu_custom_call.1} parent=1 // pred_check
      _
    $region47: #{tpu_custom_call.1} parent=1 // pred_check_branch
      %241 = sbr.rel (0) target = $region49
    $region48: #{tpu_custom_call.1} parent=1 // pred_region
      %243 = dma.done [#allocation10], 256
    $region49: #{tpu_custom_call.1} parent=1 // pred_fallthru
      _
    %244 = vsyncpa [#allocation3], 1
    %245 = vsyncpa [#allocation6], 1
    %246 = vsyncpa [#allocation4], 1
    %247 = vsyncpa [#allocation10], 1

// kernel: tpu_custom_call.1
$region0: #{tpu_custom_call.1}
  #allocation0 [shape = 'u32[]', space=smem, size = 0x4, offset = 0x4, fixed_abs, tag = 'smem constant byte address 0x4 - core index']
  #allocation1 [shape = 'u32[72,128]{1,0:T(1,128)}', space=vmem, size = 0x9000, scoped, tag = 'internal scratch']
  %s0 = inlined_call_operand.hbm [shape: f32[16,32], index: 0, kind: input, shape index: {}]
  %s1 = inlined_call_operand.hbm [shape: bf16[32,32], index: 1, kind: input, shape index: {}]
  %s2 = inlined_call_operand.vmem [shape: f32[1,32], index: 2, kind: input, shape index: {}]
  %s3 = inlined_call_operand.hbm [shape: bf16[32,160], index: 3, kind: input, shape index: {}]
  %s4 = inlined_call_operand.vmem [shape: f32[1,160], index: 4, kind: input, shape index: {}]
  %s5 = inlined_call_operand.hbm [shape: f32[16,128], index: 5, kind: output, shape index: {0}]
  %s6 = inlined_call_operand.hbm [shape: f32[16,32], index: 6, kind: output, shape index: {1}]
  %7 = xla_tuple %s5, %s6
  %s8 = sld [smem:[#allocation0]]
  $region50: #{tpu_custom_call.1} parent=0
    _
  %s10 = ssub.s32 1, %s8
  %s11 = scalar_select 0, %s10, %s8
  $region1: #{tpu_custom_call.1} parent=0
    #allocation2 [shape = 'u8[8192]{0}', space=vmem, size = 0x2000, scoped, tag = 'input window, operand 0, single buffered']
    #allocation3 [shape = 's32[1]{0}', space=sflag, size = 0x4, scoped, tag = 'scoped memory for tpu_custom_call.1']
    #allocation4 [shape = 's32[1]{0}', space=sflag, size = 0x4, scoped, tag = 'scoped memory for tpu_custom_call.1']
    #allocation5 [shape = 'u8[8192]{0}', space=vmem, size = 0x2000, scoped, tag = 'input window, operand 1, single buffered']
    #allocation6 [shape = 's32[1]{0}', space=sflag, size = 0x4, scoped, tag = 'scoped memory for tpu_custom_call.1']
    #allocation7 [shape = 'u8[16384]{0}', space=vmem, size = 0x4000, scoped, tag = 'input window, operand 3, single buffered']
    #allocation8 [shape = 'u8[8192]{0}', space=vmem, size = 0x2000, scoped, tag = 'output window, operand 0, single buffered']
    #allocation9 [shape = 'u8[8192]{0}', space=vmem, size = 0x2000, scoped, tag = 'output window, operand 1, single buffered']
    #allocation10 [shape = 's32[1]{0}', space=sflag, size = 0x4, scoped, tag = 'scoped memory for tpu_custom_call.1']
    %12 = vsyncpa [#allocation3], 0
    %13 = vsyncpa [#allocation6], 0
    %14 = vsyncpa [#allocation4], 0
    %15 = vsyncpa [#allocation10], 0
    // Predicated region
    $region2: #{tpu_custom_call.1} parent=1 // pred_check
      _
    $region3: #{tpu_custom_call.1} parent=1 // pred_check_branch
      %17 = sbr.rel (0) target = $region5
    $region4: #{tpu_custom_call.1} parent=1 // pred_region
      %19 = vsyncadd [#allocation3], 0
      %s20 = sshll.u32 %s0, 4
      %s21 = int_to_ptr.hbm [resolvable:$true] %s20
      %s22 = sshll.u32 [#allocation2], 4
      %s23 = int_to_ptr.vmem [resolvable:$true] %s22
      %28 = dma.hbm_to_vmem [thread:$0]  %s21, 256, %s23, [#allocation3], 128, 128, 8
    $region5: #{tpu_custom_call.1} parent=1 // pred_fallthru
      _
    // Predicated region
    $region6: #{tpu_custom_call.1} parent=1 // pred_check
      _
    $region7: #{tpu_custom_call.1} parent=1 // pred_check_branch
      %30 = sbr.rel (0) target = $region9
    $region8: #{tpu_custom_call.1} parent=1 // pred_region
      %32 = vsyncadd [#allocation6], 0
      %s33 = sshll.u32 %s1, 4
      %s34 = int_to_ptr.hbm [resolvable:$true] %s33
      %s35 = sshll.u32 [#allocation5], 4
      %s36 = int_to_ptr.vmem [resolvable:$true] %s35
      %41 = dma.hbm_to_vmem [thread:$0]  %s34, 256, %s36, [#allocation6], 64, 64, 4
    $region9: #{tpu_custom_call.1} parent=1 // pred_fallthru
      _
    // Predicated region
    $region10: #{tpu_custom_call.1} parent=1 // pred_check
      _
    $region11: #{tpu_custom_call.1} parent=1 // pred_check_branch
      %43 = sbr.rel (0) target = $region13
    $region12: #{tpu_custom_call.1} parent=1 // pred_region
      _
    $region13: #{tpu_custom_call.1} parent=1 // pred_fallthru
      _
    // Predicated region
    $region14: #{tpu_custom_call.1} parent=1 // pred_check
      _
    $region15: #{tpu_custom_call.1} parent=1 // pred_check_branch
      %45 = sbr.rel (0) target = $region17
    $region16: #{tpu_custom_call.1} parent=1 // pred_region
      %47 = vsyncadd [#allocation6], 0
      %s48 = sshll.u32 %s3, 4
      %s49 = int_to_ptr.hbm [resolvable:$true] %s48
      %s50 = sshll.u32 [#allocation7], 4
      %s51 = int_to_ptr.vmem [resolvable:$true] %s50
      %56 = dma.hbm_to_vmem [thread:$0]  %s49, 512, %s51, [#allocation6], 128, 128, 8
    $region17: #{tpu_custom_call.1} parent=1 // pred_fallthru
      _
    // Predicated region
    $region18: #{tpu_custom_call.1} parent=1 // pred_check
      _
    $region19: #{tpu_custom_call.1} parent=1 // pred_check_branch
      %58 = sbr.rel (0) target = $region21
    $region20: #{tpu_custom_call.1} parent=1 // pred_region
      _
    $region21: #{tpu_custom_call.1} parent=1 // pred_fallthru
      _
    // Predicated region
    $region22: #{tpu_custom_call.1} parent=1 // pred_check
      _
    $region23: #{tpu_custom_call.1} parent=1 // pred_check_branch
      %60 = sbr.rel (0) target = $region25
    $region24: #{tpu_custom_call.1} parent=1 // pred_region
      %62 = dma.done [#allocation3], 256
    $region25: #{tpu_custom_call.1} parent=1 // pred_fallthru
      _
    // Predicated region
    $region26: #{tpu_custom_call.1} parent=1 // pred_check
      _
    $region27: #{tpu_custom_call.1} parent=1 // pred_check_branch
      %64 = sbr.rel (0) target = $region29
    $region28: #{tpu_custom_call.1} parent=1 // pred_region
      %66 = dma.done [#allocation6], 256
    $region29: #{tpu_custom_call.1} parent=1 // pred_fallthru
      _
    // Predicated region
    $region30: #{tpu_custom_call.1} parent=1 // pred_check
      _
    $region31: #{tpu_custom_call.1} parent=1 // pred_check_branch
      %68 = sbr.rel (0) target = $region33
    $region32: #{tpu_custom_call.1} parent=1 // pred_region
      %70 = dma.done [#allocation6], 512
    $region33: #{tpu_custom_call.1} parent=1 // pred_fallthru
      _
    %v72 = vld [vmem:[#allocation2] sm:$0xff]
    %v73 = vld [vmem:[#allocation2 + $0x8] sm:$0xff]
    %v74 = vpack.c.bf16 %v73, %v72
    %v75 = vld [vmem:[#allocation5] sm:$0xf]
    %v76 = vld [vmem:[#allocation5 + $0x4] sm:$0xf]
    %v77 = vld [vmem:[#allocation5 + $0x8] sm:$0xf]
    %v78 = vld [vmem:[#allocation5 + $0xc] sm:$0xf]
    %v79 = vld [vmem:[%s2] sm:$0x1]
    %v81 = vperm.slane %v79, 0
    %v87 = vunpack.c.l.b16 %v75
    %v88 = vunpack.c.l.b16 %v76
    %v89 = vunpack.c.l.b16 %v77
    %v90 = vunpack.c.l.b16 %v78
    %v91 = vpack.c.b16 %v88, %v87
    %v92 = vpack.c.b16 %v90, %v89
    %vm95 = vcmask 261120
    %v97 = vsel %vm95, %v74, 0
    %99 = vmatpush.bf16.msra.mxu0 0
    %100 = vmatpush.bf16.msra.mxu0 0
    %101 = vmatpush.bf16.msra.mxu0 0
    %102 = vmatpush.bf16.msra.mxu0 0
    %103 = vmatpush.bf16.msra.mxu0 0
    %104 = vmatpush.bf16.msra.mxu0 0
    %105 = vmatpush.bf16.msra.mxu0 %v92
    %106 = vmatpush.bf16.msra.mxu0 %v91
    %107 = vmatmul.bf16.gmra.mxu0 %v97
    %v108 = vpop.f32.mrf.mxu0
    %v109 = vadd.f32 %v81, %v108
    %v110 = vpop.f32.mrf.mxu0
    %v111 = vadd.f32 %v81, %v110
    %112 = vdwg.mxu0
    %v113 = vmax.f32 %v109, 0.0
    %v114 = vmax.f32 %v111, 0.0
    %v115 = vpack.c.bf16 %v114, %v113
    %v116 = vld [vmem:[#allocation7] sm:$0xff]
    %v117 = vld [vmem:[#allocation7 + $0x8] sm:$0xff]
    %v118 = vld [vmem:[#allocation7 + $0x10] sm:$0xff]
    %v119 = vld [vmem:[#allocation7 + $0x18] sm:$0xff]
    %v120 = vld [vmem:[%s4] sm:$0x3]
    %v122 = vperm.slane %v120, 0
    %v123 = vperm.slane %v120, 1
    %v130 = vunpack.c.l.b16 %v116
    %v131 = vunpack.c.h.b16 %v116
    %v132 = vunpack.c.l.b16 %v117
    %v133 = vunpack.c.h.b16 %v117
    %v134 = vunpack.c.l.b16 %v118
    %v135 = vunpack.c.h.b16 %v118
    %v136 = vunpack.c.l.b16 %v119
    %v137 = vunpack.c.h.b16 %v119
    %v138 = vpack.c.b16 %v132, %v130
    %v139 = vpack.c.b16 %v133, %v131
    %v140 = vpack.c.b16 %v136, %v134
    %v141 = vpack.c.b16 %v137, %v135
    %v147 = vsel %vm95, %v115, 0
    %149 = vmatpush.bf16.msra.mxu0 0
    %150 = vmatpush.bf16.msra.mxu0 0
    %151 = vmatpush.bf16.msra.mxu0 0
    %152 = vmatpush.bf16.msra.mxu0 0
    %153 = vmatpush.bf16.msra.mxu0 0
    %154 = vmatpush.bf16.msra.mxu0 0
    %155 = vmatpush.bf16.msra.mxu0 %v140
    %156 = vmatpush.bf16.msra.mxu0 %v138
    %157 = vmatmul.bf16.gmra.mxu0 %v147
    %v158 = vpop.f32.mrf.mxu0
    %v159 = vadd.f32 %v122, %v158
    %v160 = vpop.f32.mrf.mxu0
    %v161 = vadd.f32 %v122, %v160
    %162 = vdwg.mxu0
    %163 = vmatpush.bf16.msra.mxu0 0
    %164 = vmatpush.bf16.msra.mxu0 0
    %165 = vmatpush.bf16.msra.mxu0 0
    %166 = vmatpush.bf16.msra.mxu0 0
    %167 = vmatpush.bf16.msra.mxu0 0
    %168 = vmatpush.bf16.msra.mxu0 0
    %169 = vmatpush.bf16.msra.mxu0 %v141
    %170 = vmatpush.bf16.msra.mxu0 %v139
    %171 = vmatmul.bf16.gmra.mxu0 %v147
    %v172 = vpop.f32.mrf.mxu0
    %v173 = vadd.f32 %v123, %v172
    %v174 = vpop.f32.mrf.mxu0
    %v175 = vadd.f32 %v123, %v174
    %176 = vdwg.mxu0
    %v177 = vlaneseq
    %v178 = vand.u32 %v177, 127
    %vm179 = vcmp.lt.s32.totalorder %v178, 4
    %v180 = vsel %vm179, %v159, -1e+30
    %v181 = vsel %vm179, %v161, -1e+30
    %182 = vmax.xlane.f32.xlu0 %v180
    %v183 = vpop.xlane.xlu0 %182
    %184 = vmax.xlane.f32.xlu0 %v181
    %v185 = vpop.xlane.xlu0 %184
    %v186 = vsub.f32 %v180, %v183
    %v187 = vsub.f32 %v181, %v185
    %v188 = vmul.f32 %v186, 1.442695
    %v189 = vpow.pop %v188
    %v190 = vmul.f32 %v187, 1.442695
    %v191 = vpow.pop %v190
    %192 = vadd.xlane.f32.xlu0 %v189
    %v193 = vpop.xlane.xlu0 %192
    %194 = vadd.xlane.f32.xlu0 %v191
    %v195 = vpop.xlane.xlu0 %194
    %v196 = vlog2.pop %v193
    %v197 = vmul.f32 %v196, 0.6931472
    %v198 = vlog2.pop %v195
    %v199 = vmul.f32 %v198, 0.6931472
    %v200 = vsub.f32 %v159, %v183
    %v201 = vsub.f32 %v161, %v185
    %v202 = vsub.f32 %v200, %v197
    %v203 = vsub.f32 %v201, %v199
    %v204 = vsel %vm179, %v202, 0.0
    %v205 = vsel %vm179, %v203, 0.0
    %206 = vst [vmem:[#allocation8] sm:$0xff] %v204
    %207 = vst [vmem:[#allocation8 + $0x8] sm:$0xff] %v205
    %208 = vst.msk [vmem:[#allocation9] sm:$0xff] %vm95, %v173
    %209 = vst.msk [vmem:[#allocation9 + $0x8] sm:$0xff] %vm95, %v175
    // Predicated region
    $region34: #{tpu_custom_call.1} parent=1 // pred_check
      _
    $region35: #{tpu_custom_call.1} parent=1 // pred_check_branch
      %211 = sbr.rel (0) target = $region37
    $region36: #{tpu_custom_call.1} parent=1 // pred_region
      %213 = vsyncadd [#allocation4], 0
      %s214 = sshll.u32 [#allocation8], 4
      %s215 = int_to_ptr.vmem [resolvable:$true] %s214
      %s216 = sshll.u32 %s5, 4
      %s217 = int_to_ptr.hbm [resolvable:$true] %s216
      %222 = dma.vmem_to_hbm [thread:$0]  %s215, 256, %s217, [#allocation4], 128, 128, 8
    $region37: #{tpu_custom_call.1} parent=1 // pred_fallthru
      _
    // Predicated region
    $region38: #{tpu_custom_call.1} parent=1 // pred_check
      _
    $region39: #{tpu_custom_call.1} parent=1 // pred_check_branch
      %224 = sbr.rel (0) target = $region41
    $region40: #{tpu_custom_call.1} parent=1 // pred_region
      %226 = vsyncadd [#allocation10], 0
      %s227 = sshll.u32 [#allocation9], 4
      %s228 = int_to_ptr.vmem [resolvable:$true] %s227
      %s229 = sshll.u32 %s6, 4
      %s230 = int_to_ptr.hbm [resolvable:$true] %s229
      %235 = dma.vmem_to_hbm [thread:$0]  %s228, 256, %s230, [#allocation10], 128, 128, 8
    $region41: #{tpu_custom_call.1} parent=1 // pred_fallthru
      _
    // Predicated region
    $region42: #{tpu_custom_call.1} parent=1 // pred_check
      _
    $region43: #{tpu_custom_call.1} parent=1 // pred_check_branch
      %237 = sbr.rel (0) target = $region45
    $region44: #{tpu_custom_call.1} parent=1 // pred_region
      %239 = dma.done [#allocation4], 256
    $region45: #{tpu_custom_call.1} parent=1 // pred_fallthru
      _
    // Predicated region
    $region46: #{tpu_custom_call.1} parent=1 // pred_check
      _
    $region47: #{tpu_custom_call.1} parent=1 // pred_check_branch
      %241 = sbr.rel (0) target = $region49
    $region48: #{tpu_custom_call.1} parent=1 // pred_region
      %243 = dma.done [#allocation10], 256
    $region49: #{tpu_custom_call.1} parent=1 // pred_fallthru
      _
    %244 = vsyncpa [#allocation3], 1
    %245 = vsyncpa [#allocation6], 1
    %246 = vsyncpa [#allocation4], 1
    %247 = vsyncpa [#allocation10], 1

</llo_original>
